<compile_context>
chip_gen: v5e
topology: v5e:2x2
jax: 0.10.0
libtpu: 0.0.40
codegen_flags: <defaults>
</compile_context>

<pallas_src>
import functools
import math

import jax
import jax.numpy as jnp
from jax.experimental import pallas as pl
from jax.experimental.pallas import tpu as pltpu


# ----------------------------------------------------------------------------- utils

def _vmem_budget():
    """Generation-aware (per-step working budget, vmem_limit_bytes)."""
    cap = 64 * 1024 * 1024
    try:
        info = pltpu.get_tpu_info()
        cap = int(info.vmem_capacity_bytes) or cap
    except Exception:
        pass
    return cap // 5, cap // 2


def _pick_tile(n, per_batch_bytes, budget_bytes, granularity, max_tile=None):
    """Pick (b_tile, n_pad).

    Multi-step tiles are multiples of `granularity` so block shapes satisfy the
    TPU (8, 128) layout constraints; otherwise a single full-extent block is used
    (full-extent dims are exempt from the divisibility rule).
    """
    m = max(int(granularity), 1)
    bt_fit = max(int(budget_bytes) // max(int(per_batch_bytes), 1), 1)
    if max_tile is not None:
        bt_fit = min(bt_fit, int(max_tile))
    bt_cap = (bt_fit // m) * m
    if bt_cap >= m and n > m:
        n_units = -(-n // m)                      # ceil(n / m)
        target_steps = 4 if n_units >= 4 else 2   # >= 2 steps per TC on v7x megacore
        b_tile = min(bt_cap, max(m, (n_units // target_steps) * m))
        n_pad = -(-n // b_tile) * b_tile
        return b_tile, n_pad
    return n, n


# ------------------------------------------------------------------- main flat kernel

def _sepconv1d_flat_kernel(x_ref, wdw_ref, wpw_ref, o_ref, *,
                           kernel_size, dilation, padding, l_in, c_in, c_out):
    """stride == 1 and L_out == L_in ("same") path.

    x_ref: (C_in, b_tile*L) flat slab; o_ref: (C_out, b_tile*L) flat slab.
    """
    chunk = x_ref.shape[1]

    wdw = wdw_ref[...].astype(jnp.float32)          # (C_in, K)
    wpw = wpw_ref[...].astype(jnp.float32)          # (C_out, C_in)
    x = x_ref[...].astype(jnp.float32)              # cast once (f32 accumulate)

    if padding > 0:
        z = jnp.zeros((c_in, padding), jnp.float32)
        xp = jnp.concatenate([z, x, z], axis=-1)    # register-level zero halo
        # per-sequence position of every fused lane (for batch-boundary masking)
        j = jax.lax.broadcasted_iota(jnp.int32, (1, chunk), 1) % l_in
    else:
        xp = x
        j = None

    # Depthwise conv: K shifted lane slices + VPU FMAs; edge taps masked so the
    # fused (batch, length) lane axis never leaks across batch boundaries.
    acc = jnp.zeros((c_in, chunk), jnp.float32)
    for k in range(kernel_size):
        start = k * dilation
        shift = start - padding                     # signed within-sequence shift
        tap = xp[:, start:start + chunk]            # (C_in, chunk)
        if shift != 0:
            src_pos = j + shift
            valid = jnp.logical_and(src_pos >= 0, src_pos < l_in)
            tap = jnp.where(valid, tap, 0.0)
        acc = acc + wdw[:, k:k + 1] * tap           # (C_in,1) broadcast over lanes

    # Pointwise 1x1 conv: single wide MXU contraction over C_in.
    out = jnp.dot(wpw, acc, preferred_element_type=jnp.float32)   # (C_out, chunk)
    o_ref[...] = out.astype(o_ref.dtype)


# -------------------------------------------------------- general (fallback) kernel

def _sepconv1d_general_kernel(x_ref, wdw_ref, wpw_ref, o_ref, *scratch,
                              kernel_size, stride, dilation, padding,
                              l_in, l_out, b_tile, c_in, c_out):
    """General stride/dilation/'valid' path. x_ref: (C_in, b_tile, L_in)."""
    wdw = wdw_ref[...].astype(jnp.float32)          # (C_in, K)
    wpw = wpw_ref[...].astype(jnp.float32)          # (C_out, C_in)

    acc = jnp.zeros((c_in, b_tile, l_out), jnp.float32)
    if stride == 1:
        x = x_ref[...].astype(jnp.float32)
        if padding > 0:
            z = jnp.zeros((c_in, b_tile, padding), jnp.float32)
            x = jnp.concatenate([z, x, z], axis=-1)
        for k in range(kernel_size):
            s = k * dilation
            tap = x[:, :, s:s + l_out]
            acc = acc + wdw[:, k:k + 1][:, :, None] * tap
    else:
        if padding > 0:
            xp_ref = scratch[0]                     # only allocated in this case
            z = jnp.zeros((c_in, b_tile, padding), jnp.float32)
            xp_ref[:, :, 0:padding] = z
            xp_ref[:, :, padding + l_in:padding + l_in + padding] = z
            xp_ref[:, :, padding:padding + l_in] = x_ref[...].astype(jnp.float32)
            src = xp_ref
        else:
            src = x_ref
        for k in range(kernel_size):
            s = k * dilation
            tap = src[:, :, pl.ds(s, l_out, stride=stride)].astype(jnp.float32)
            acc = acc + wdw[:, k:k + 1][:, :, None] * tap

    # TODO(synk): fold this per-batch matmul loop into one (C_out,C_in)@(C_in,b*L)
    # contraction (needs an in-kernel lane relayout); only hit for stride != 1 or
    # non-"same" output lengths, which the ConvMixer module does not use by default.
    for b in range(b_tile):
        res = jnp.dot(wpw, acc[:, b, :], preferred_element_type=jnp.float32)
        o_ref[:, b, :] = res.astype(o_ref.dtype)


# ------------------------------------------------------------------------- wrapper

def separable_conv1d(x, w_depthwise, w_pointwise, *, stride=1, padding=0, dilation=1):
    """x: (N, C_in, L). w_depthwise: (C_in, K). w_pointwise: (C_out, C_in).

    Returns (N, C_out, L_out).  Inputs/weights may be f32 or bf16; compute is f32.
    Matches PyTorch Conv1d(groups=C_in) -> Conv1d(kernel_size=1), bias=False.
    """
    n, c_in, l_in = x.shape
    c_in_w, k = w_depthwise.shape
    assert c_in_w == c_in
    c_out, c_in_p = w_pointwise.shape
    assert c_in_p == c_in

    l_pad = l_in + 2 * padding
    l_out = (l_pad - dilation * (k - 1) - 1) // stride + 1
    assert l_out >= 1, "output length must be positive"

    budget, vmem_limit = _vmem_budget()
    itemsize = jnp.dtype(x.dtype).itemsize
    cparams = pltpu.CompilerParams(dimension_semantics=("parallel",),
                                   vmem_limit_bytes=int(vmem_limit))

    x_t = jnp.transpose(x, (1, 0, 2))               # (C_in, N, L): layout plumbing

    flat_ok = (stride == 1) and (l_out == l_in)
    if flat_ok:
        # ------- lane-dense flat path -------
        per_batch = (2 * (c_in * l_in + c_out * l_out) * itemsize
                     + (4 * c_in + 2 * c_out) * l_pad * 4)
        gran = 128 // math.gcd(l_in, 128)           # b_tile*L multiple of 128
        b_tile, n_pad = _pick_tile(n, per_batch, budget, gran)
        chunk = b_tile * l_in
        grid = (n_pad // b_tile,)

        if n_pad != n:
            x_t = jnp.pad(x_t, ((0, 0), (0, n_pad - n), (0, 0)))
        x_flat = x_t.reshape(c_in, n_pad * l_in)

        kernel = functools.partial(
            _sepconv1d_flat_kernel, kernel_size=k, dilation=dilation,
            padding=padding, l_in=l_in, c_in=c_in, c_out=c_out)

        out_flat = pl.pallas_call(
            kernel,
            out_shape=jax.ShapeDtypeStruct((c_out, n_pad * l_out), x.dtype),
            grid_spec=pltpu.PrefetchScalarGridSpec(
                num_scalar_prefetch=0,
                grid=grid,
                in_specs=[
                    pl.BlockSpec((c_in, chunk), lambda b: (0, b)),
                    pl.BlockSpec((c_in, k), lambda b: (0, 0)),
                    pl.BlockSpec((c_out, c_in), lambda b: (0, 0)),
                ],
                out_specs=pl.BlockSpec((c_out, chunk), lambda b: (0, b))),
            compiler_params=cparams,
        )(x_flat, w_depthwise, w_pointwise)

        out = out_flat.reshape(c_out, n_pad, l_out)[:, :n]
        return jnp.transpose(out, (1, 0, 2))

    # ------- general fallback path -------
    per_batch = (2 * (c_in * l_in + c_out * l_out) * itemsize
                 + (3 * c_in + 2 * c_out) * max(l_pad, l_out) * 4)
    need_scratch = (stride != 1 and padding > 0)
    if need_scratch:
        per_batch += c_in * l_pad * 4
    b_tile, n_pad = _pick_tile(n, per_batch, budget, granularity=8, max_tile=32)
    grid = (n_pad // b_tile,)

    if n_pad != n:
        x_t = jnp.pad(x_t, ((0, 0), (0, n_pad - n), (0, 0)))

    kernel = functools.partial(
        _sepconv1d_general_kernel, kernel_size=k, stride=stride, dilation=dilation,
        padding=padding, l_in=l_in, l_out=l_out, b_tile=b_tile,
        c_in=c_in, c_out=c_out)

    scratch_shapes = []
    if need_scratch:
        scratch_shapes.append(pltpu.VMEM((c_in, b_tile, l_pad), jnp.float32))

    out3 = pl.pallas_call(
        kernel,
        out_shape=jax.ShapeDtypeStruct((c_out, n_pad, l_out), x.dtype),
        grid_spec=pltpu.PrefetchScalarGridSpec(
            num_scalar_prefetch=0,
            grid=grid,
            in_specs=[
                pl.BlockSpec((c_in, b_tile, l_in), lambda b: (0, b, 0)),
                pl.BlockSpec((c_in, k), lambda b: (0, 0)),
                pl.BlockSpec((c_out, c_in), lambda b: (0, 0)),
            ],
            out_specs=pl.BlockSpec((c_out, b_tile, l_out), lambda b: (0, b, 0)),
            scratch_shapes=scratch_shapes),
        compiler_params=cparams,
    )(x_t, w_depthwise, w_pointwise)

    return jnp.transpose(out3[:, :n, :], (1, 0, 2))


# ------------------------------------------------------------------------ reference

def _reference(x, w_depthwise, w_pointwise, *, stride, padding, dilation):
    """Pure-JAX reference mirroring PyTorch Conv1d semantics (bias=False)."""
    c_in = x.shape[1]
    y = jax.lax.conv_general_dilated(
        x, w_depthwise[:, None, :],
        window_strides=(stride,), padding=[(padding, padding)],
        rhs_dilation=(dilation,),
        dimension_numbers=("NCH", "OIH", "NCH"),
        feature_group_count=c_in)
    z = jax.lax.conv_general_dilated(
        y, w_pointwise[:, :, None],
        window_strides=(1,), padding=[(0, 0)],
        dimension_numbers=("NCH", "OIH", "NCH"))
    return z


if __name__ == "__main__":
    # SeparableConv1d(in_channels=8, out_channels=16, kernel_size=3,
    #                 stride=1, padding=1, dilation=1, bias=False, pointwise=True)
    batch, in_channels, out_channels = 2, 8, 16
    length, kernel_size, stride, padding, dilation = 16, 3, 1, 1, 1

    key = jax.random.PRNGKey(0)
    kx, kdw, kpw = jax.random.split(key, 3)

    x = jax.random.normal(kx, (batch, in_channels, length), dtype=jnp.float32)
    # PyTorch shapes: conv1d.weight (C_in, 1, K); pointwise.weight (C_out, C_in, 1).
    w_depthwise = jax.random.normal(kdw, (in_channels, kernel_size), dtype=jnp.float32) * 0.1
    w_pointwise = jax.random.normal(kpw, (out_channels, in_channels), dtype=jnp.float32) * 0.1

    out = separable_conv1d(x, w_depthwise, w_pointwise,
                           stride=stride, padding=padding, dilation=dilation)
    out = jax.block_until_ready(out)

    ref = _reference(x, w_depthwise, w_pointwise,
                     stride=stride, padding=padding, dilation=dilation)
    assert out.shape == ref.shape, (out.shape, ref.shape)
    assert jnp.allclose(out, ref, atol=1e-5, rtol=1e-5), float(jnp.max(jnp.abs(out - ref)))

    print("KERNEL_OK")
</pallas_src>

<mosaic_0001>
module attributes {stable_mosaic.version = 11 : i64} {
  func.func @_sepconv1d_flat_kernel(%arg0: i32, %arg1: memref<8x32xf32, #tpu.memory_space<vmem>>, %arg2: memref<8x3xf32, #tpu.memory_space<vmem>>, %arg3: memref<16x8xf32, #tpu.memory_space<vmem>>, %arg4: memref<16x32xf32, #tpu.memory_space<vmem>>) attributes {dimension_semantics = [#tpu.dimension_semantics<parallel>], iteration_bounds = array<i64: 1>, scalar_prefetch = 0 : i64, scratch_operands = 0 : i64, tpu.core_type = #tpu.core_type<tc>, window_params = [{transform_indices = @transform_0, window_bounds = array<i64: 8, 32>}, {pipeline_mode = #tpu.pipeline_mode<synchronous>, transform_indices = @transform_1, window_bounds = array<i64: 8, 3>}, {pipeline_mode = #tpu.pipeline_mode<synchronous>, transform_indices = @transform_2, window_bounds = array<i64: 16, 8>}, {transform_indices = @transform_3, window_bounds = array<i64: 16, 32>}]} {
    %c0 = arith.constant 0 : index
    %c0_0 = arith.constant 0 : index
    %0 = vector.load %arg2[%c0, %c0_0] : memref<8x3xf32, #tpu.memory_space<vmem>>, vector<8x3xf32>
    %c0_1 = arith.constant 0 : index
    %c0_2 = arith.constant 0 : index
    %1 = vector.load %arg3[%c0_1, %c0_2] : memref<16x8xf32, #tpu.memory_space<vmem>>, vector<16x8xf32>
    %c0_3 = arith.constant 0 : index
    %c0_4 = arith.constant 0 : index
    %2 = vector.load %arg1[%c0_3, %c0_4] : memref<8x32xf32, #tpu.memory_space<vmem>>, vector<8x32xf32>
    %cst = arith.constant 0.000000e+00 : f32
    %3 = vector.broadcast %cst : f32 to vector<8x1xf32>
    %4 = tpu.concatenate %3, %2, %3 in 1 : vector<8x1xf32>, vector<8x32xf32>, vector<8x1xf32> -> vector<8x34xf32>
    %5 = tpu.iota {dimensions = array<i32: 1>} : vector<1x32xi32>
    %c16_i32 = arith.constant 16 : i32
    %c0_i32 = arith.constant 0 : i32
    %6 = arith.cmpi eq, %c16_i32, %c0_i32 : i32
    %c1_i32 = arith.constant 1 : i32
    %7 = arith.select %6, %c1_i32, %c16_i32 : i32
    %8 = vector.broadcast %7 : i32 to vector<1x32xi32>
    %9 = arith.remsi %5, %8 : vector<1x32xi32>
    %c0_i32_5 = arith.constant 0 : i32
    %10 = vector.broadcast %c0_i32_5 : i32 to vector<1x32xi32>
    %11 = arith.cmpi ne, %9, %10 : vector<1x32xi32>
    %c0_i32_6 = arith.constant 0 : i32
    %12 = vector.broadcast %c0_i32_6 : i32 to vector<1x32xi32>
    %13 = arith.cmpi slt, %9, %12 : vector<1x32xi32>
    %c0_i32_7 = arith.constant 0 : i32
    %14 = arith.cmpi slt, %7, %c0_i32_7 : i32
    %15 = vector.broadcast %14 : i1 to vector<1x32xi1>
    %16 = vector.broadcast %15 : vector<1x32xi1> to vector<1x32xi1>
    %17 = arith.xori %13, %16 : vector<1x32xi1>
    %18 = arith.andi %17, %11 : vector<1x32xi1>
    %19 = vector.broadcast %7 : i32 to vector<1x32xi32>
    %20 = arith.addi %9, %19 : vector<1x32xi32>
    %21 = arith.select %18, %20, %9 : vector<1x32xi1>, vector<1x32xi32>
    %cst_8 = arith.constant 0.000000e+00 : f32
    %22 = vector.broadcast %cst_8 : f32 to vector<8x32xf32>
    %23 = vector.extract_strided_slice %4 {offsets = [0, 0], sizes = [8, 32], strides = [1, 1]} : vector<8x34xf32> to vector<8x32xf32>
    %c-1_i32 = arith.constant -1 : i32
    %24 = vector.broadcast %c-1_i32 : i32 to vector<1x32xi32>
    %25 = arith.addi %21, %24 : vector<1x32xi32>
    %c0_i32_9 = arith.constant 0 : i32
    %26 = vector.broadcast %c0_i32_9 : i32 to vector<1x32xi32>
    %27 = arith.cmpi sge, %25, %26 : vector<1x32xi32>
    %c16_i32_10 = arith.constant 16 : i32
    %28 = vector.broadcast %c16_i32_10 : i32 to vector<1x32xi32>
    %29 = arith.cmpi slt, %25, %28 : vector<1x32xi32>
    %30 = arith.andi %27, %29 : vector<1x32xi1>
    %cst_11 = arith.constant 0.000000e+00 : f32
    %31 = vector.shape_cast %30 : vector<1x32xi1> to vector<1x32xi1>
    %32 = vector.broadcast %31 : vector<1x32xi1> to vector<8x32xi1>
    %33 = vector.broadcast %cst_11 : f32 to vector<8x32xf32>
    %34 = arith.select %32, %23, %33 : vector<8x32xi1>, vector<8x32xf32>
    %35 = vector.extract_strided_slice %0 {offsets = [0, 0], sizes = [8, 1], strides = [1, 1]} : vector<8x3xf32> to vector<8x1xf32>
    %36 = vector.broadcast %35 : vector<8x1xf32> to vector<8x32xf32>
    %37 = arith.mulf %36, %34 : vector<8x32xf32>
    %38 = arith.addf %22, %37 : vector<8x32xf32>
    %39 = vector.extract_strided_slice %4 {offsets = [0, 1], sizes = [8, 32], strides = [1, 1]} : vector<8x34xf32> to vector<8x32xf32>
    %40 = vector.extract_strided_slice %0 {offsets = [0, 1], sizes = [8, 1], strides = [1, 1]} : vector<8x3xf32> to vector<8x1xf32>
    %41 = vector.broadcast %40 : vector<8x1xf32> to vector<8x32xf32>
    %42 = arith.mulf %41, %39 : vector<8x32xf32>
    %43 = arith.addf %38, %42 : vector<8x32xf32>
    %44 = vector.extract_strided_slice %4 {offsets = [0, 2], sizes = [8, 32], strides = [1, 1]} : vector<8x34xf32> to vector<8x32xf32>
    %c1_i32_12 = arith.constant 1 : i32
    %45 = vector.broadcast %c1_i32_12 : i32 to vector<1x32xi32>
    %46 = arith.addi %21, %45 : vector<1x32xi32>
    %c0_i32_13 = arith.constant 0 : i32
    %47 = vector.broadcast %c0_i32_13 : i32 to vector<1x32xi32>
    %48 = arith.cmpi sge, %46, %47 : vector<1x32xi32>
    %c16_i32_14 = arith.constant 16 : i32
    %49 = vector.broadcast %c16_i32_14 : i32 to vector<1x32xi32>
    %50 = arith.cmpi slt, %46, %49 : vector<1x32xi32>
    %51 = arith.andi %48, %50 : vector<1x32xi1>
    %cst_15 = arith.constant 0.000000e+00 : f32
    %52 = vector.shape_cast %51 : vector<1x32xi1> to vector<1x32xi1>
    %53 = vector.broadcast %52 : vector<1x32xi1> to vector<8x32xi1>
    %54 = vector.broadcast %cst_15 : f32 to vector<8x32xf32>
    %55 = arith.select %53, %44, %54 : vector<8x32xi1>, vector<8x32xf32>
    %56 = vector.extract_strided_slice %0 {offsets = [0, 2], sizes = [8, 1], strides = [1, 1]} : vector<8x3xf32> to vector<8x1xf32>
    %57 = vector.broadcast %56 : vector<8x1xf32> to vector<8x32xf32>
    %58 = arith.mulf %57, %55 : vector<8x32xf32>
    %59 = arith.addf %43, %58 : vector<8x32xf32>
    %cst_16 = arith.constant dense<0.000000e+00> : vector<16x32xf32>
    %60 = tpu.matmul %1, %59, %cst_16 {dimension_numbers = #tpu.dot_dimension_numbers<[1], [0], [0], [1], [0, 0, 1, 1], [], []>} : vector<16x8xf32>, vector<8x32xf32>, vector<16x32xf32> -> vector<16x32xf32>
    %c0_17 = arith.constant 0 : index
    %c0_18 = arith.constant 0 : index
    %61 = vector.load %arg4[%c0_17, %c0_18] : memref<16x32xf32, #tpu.memory_space<vmem>>, vector<16x32xf32>
    tpu.vector_store %arg4[%c0_17, %c0_18], %60 {strides = array<i32>} : memref<16x32xf32, #tpu.memory_space<vmem>>, vector<16x32xf32>,
    return
  }
  func.func @transform_0(%arg0: i32) -> (i32, i32) {
    %c0_i32 = arith.constant 0 : i32
    %c0_i32_0 = arith.constant 0 : i32
    return %c0_i32, %arg0 : i32, i32
  }
  func.func @transform_1(%arg0: i32) -> (i32, i32) {
    %c0_i32 = arith.constant 0 : i32
    %c0_i32_0 = arith.constant 0 : i32
    %c0_i32_1 = arith.constant 0 : i32
    return %c0_i32, %c0_i32_0 : i32, i32
  }
  func.func @transform_2(%arg0: i32) -> (i32, i32) {
    %c0_i32 = arith.constant 0 : i32
    %c0_i32_0 = arith.constant 0 : i32
    %c0_i32_1 = arith.constant 0 : i32
    return %c0_i32, %c0_i32_0 : i32, i32
  }
  func.func @transform_3(%arg0: i32) -> (i32, i32) {
    %c0_i32 = arith.constant 0 : i32
    %c0_i32_0 = arith.constant 0 : i32
    return %c0_i32, %arg0 : i32, i32
  }
}

</mosaic_0001>

<llo_original>
// kernel: tpu_custom_call.1
$region0: #{tpu_custom_call.1}
  #allocation0 [shape = 'u32[]', space=smem, size = 0x4, offset = 0x4, fixed_abs, tag = 'smem constant byte address 0x4 - core index']
  #allocation1 [shape = 'u32[72,128]{1,0:T(1,128)}', space=vmem, size = 0x9000, scoped, tag = 'internal scratch']
  %s0 = inlined_call_operand.vmem [shape: f32[8,32], index: 0, kind: input, shape index: {}]
  %s1 = inlined_call_operand.vmem [shape: f32[8,3], index: 1, kind: input, shape index: {}]
  %s2 = inlined_call_operand.vmem [shape: f32[16,8], index: 2, kind: input, shape index: {}]
  %s3 = inlined_call_operand.hbm [shape: f32[16,32], index: 3, kind: output, shape index: {}]
  %s4 = sld [smem:[#allocation0]]
  $region22: #{tpu_custom_call.1} parent=0
    _
  %s6 = ssub.s32 1, %s4
  %s7 = scalar_select 0, %s6, %s4
  $region1: #{tpu_custom_call.1} parent=0
    #allocation2 [shape = 'u8[8192]{0}', space=vmem, size = 0x2000, scoped, tag = 'output window, operand 0, single buffered']
    #allocation3 [shape = 's32[1]{0}', space=sflag, size = 0x4, scoped, tag = 'scoped memory for tpu_custom_call.1']
    %8 = vsyncpa [#allocation3], 0
    // Predicated region
    $region2: #{tpu_custom_call.1} parent=1 // pred_check
      _
    $region3: #{tpu_custom_call.1} parent=1 // pred_check_branch
      %10 = sbr.rel (0) target = $region5
    $region4: #{tpu_custom_call.1} parent=1 // pred_region
      _
    $region5: #{tpu_custom_call.1} parent=1 // pred_fallthru
      _
    // Predicated region
    $region6: #{tpu_custom_call.1} parent=1 // pred_check
      _
    $region7: #{tpu_custom_call.1} parent=1 // pred_check_branch
      %12 = sbr.rel (0) target = $region9
    $region8: #{tpu_custom_call.1} parent=1 // pred_region
      _
    $region9: #{tpu_custom_call.1} parent=1 // pred_fallthru
      _
    // Predicated region
    $region10: #{tpu_custom_call.1} parent=1 // pred_check
      _
    $region11: #{tpu_custom_call.1} parent=1 // pred_check_branch
      %14 = sbr.rel (0) target = $region13
    $region12: #{tpu_custom_call.1} parent=1 // pred_region
      _
    $region13: #{tpu_custom_call.1} parent=1 // pred_fallthru
      _
    %v15 = vld [vmem:[%s1] sm:$0xff]
    %v16 = vld [vmem:[%s2] sm:$0xff]
    %v17 = vld [vmem:[%s2 + $0x8] sm:$0xff]
    %v18 = vld [vmem:[%s0] sm:$0xff]
    %20 = vrot.lane.b32.xlu0 %v18, 1
    %v21 = vpop.permute.xlu0 %20
    %vm23 = vcmask 7168
    %v24 = vsel %vm23, 0.0, %v21
    %vm25 = vcmask 269312
    %v26 = vsel %vm25, %v24, 0.0
    %v27 = vlaneseq
    %v28 = vand.u32 %v27, 127
    %vm29 = vcmp.lt.s32.totalorder %v28, 0
    %v30 = vsub.s32 0, %v28
    %v31 = vsel %vm29, %v30, %v28
    %v32 = vshrl.u32 %v31, 4
    %v33 = vand.u32 %v31, 15
    %v34 = vsub.s32 0, %v33
    %v35 = vsel %vm29, %v34, %v33
    %vm36 = vcmp.ne.s32.totalorder %v35, 0
    %vm37 = vcmp.lt.s32.totalorder %v35, 0
    %vm38 = vmand %vm37, %vm36
    %v39 = vadd.s32 %v35, 16
    %v40 = vsel %vm38, %v39, %v35
    %v41 = vadd.s32 %v40, 4294967295
    %vm42 = vcmp.ge.s32.totalorder %v41, 0
    %vm43 = vcmp.lt.s32.totalorder %v41, 16
    %vm44 = vmand %vm42, %vm43
    %v45 = vsel %vm44, 1, 0
    %vm46 = vcmp.eq.s32.totalorder %v45, 1
    %v47 = vsel %vm46, %v26, 0.0
    %49 = vset.pattern.permute.xlu0 0
    %50 = vperm.xlu0 %49, %v15
    %v51 = vpop.permute.xlu0 %50
    %v53 = vmul.f32 %v51, %v47
    %v54 = vadd.f32 %v53, 0.0
    %55 = vset.pattern.permute.xlu0 1
    %56 = vperm.xlu0 %55, %v15
    %v57 = vpop.permute.xlu0 %56
    %v59 = vmul.f32 %v57, %v26
    %61 = vrot.lane.b32.xlu0 %v59, 127
    %v62 = vpop.permute.xlu0 %61
    %v64 = vadd.f32 %v54, %v62
    %v65 = vadd.s32 %v40, 1
    %vm66 = vcmp.ge.s32.totalorder %v65, 0
    %vm67 = vcmp.lt.s32.totalorder %v65, 16
    %vm68 = vmand %vm66, %vm67
    %v69 = vsel %vm68, 1, 0
    %vm70 = vcmp.eq.s32.totalorder %v69, 1
    %72 = vrot.lane.b32.xlu0 %v26, 126
    %v73 = vpop.permute.xlu0 %72
    %v75 = vsel %vm70, %v73, 0.0
    %76 = vset.pattern.permute.xlu0 2
    %77 = vperm.xlu0 %76, %v15
    %v78 = vpop.permute.xlu0 %77
    %v80 = vmul.f32 %v78, %v75
    %v81 = vadd.f32 %v64, %v80
    %vm82 = vcmask 64512
    %v84 = vsel %vm82, %v16, 0
    %v87 = vsel %vm82, %v17, 0
    %89 = vmatpush.msra.mxu0 0.0
    %90 = vmatpush.msra.mxu0 0.0
    %91 = vmatpush.msra.mxu0 0.0
    %92 = vmatpush.msra.mxu0 0.0
    %93 = vmatpush.msra.mxu0 0.0
    %94 = vmatpush.msra.mxu0 0.0
    %95 = vmatpush.msra.mxu0 0.0
    %96 = vmatpush.msra.mxu0 0.0
    %97 = vmatpush.msra.mxu0 0.0
    %98 = vmatpush.msra.mxu0 0.0
    %99 = vmatpush.msra.mxu0 0.0
    %100 = vmatpush.msra.mxu0 0.0
    %101 = vmatpush.msra.mxu0 0.0
    %102 = vmatpush.msra.mxu0 0.0
    %103 = vmatpush.msra.mxu0 0.0
    %104 = vmatpush.msra.mxu0 %v81
    %105 = vmatmul.f32.gmra.mxu0 %v84
    %v106 = vpop.f32.mrf.mxu0
    %v107 = vadd.f32 0.0, %v106
    %108 = vmatmul.f32.gmra.mxu0 %v87
    %v109 = vpop.f32.mrf.mxu0
    %v110 = vadd.f32 0.0, %v109
    %111 = vdwg.mxu0
    %vm112 = vcmask 261120
    %113 = vst.msk [vmem:[#allocation2] sm:$0xff] %vm112, %v107
    %114 = vst.msk [vmem:[#allocation2 + $0x8] sm:$0xff] %vm112, %v110
    // Predicated region
    $region14: #{tpu_custom_call.1} parent=1 // pred_check
      _
    $region15: #{tpu_custom_call.1} parent=1 // pred_check_branch
      %116 = sbr.rel (0) target = $region17
    $region16: #{tpu_custom_call.1} parent=1 // pred_region
      %118 = vsyncadd [#allocation3], 0
      %s119 = sshll.u32 [#allocation2], 4
      %s120 = int_to_ptr.vmem [resolvable:$true] %s119
      %s121 = sshll.u32 %s3, 4
      %s122 = int_to_ptr.hbm [resolvable:$true] %s121
      %127 = dma.vmem_to_hbm [thread:$0]  %s120, 256, %s122, [#allocation3], 128, 128, 8
    $region17: #{tpu_custom_call.1} parent=1 // pred_fallthru
      _
    // Predicated region
    $region18: #{tpu_custom_call.1} parent=1 // pred_check
      _
    $region19: #{tpu_custom_call.1} parent=1 // pred_check_branch
      %129 = sbr.rel (0) target = $region21
    $region20: #{tpu_custom_call.1} parent=1 // pred_region
      %131 = dma.done [#allocation3], 256
    $region21: #{tpu_custom_call.1} parent=1 // pred_fallthru
      _
    %132 = vsyncpa [#allocation3], 1

</llo_original>
